<compile_context>
chip_gen: v7x
topology: tpu7x:2x2x1
jax: 0.10.0
libtpu: 0.0.40
codegen_flags: <defaults>
</compile_context>

<pallas_src>
import functools

import jax
import jax.numpy as jnp
from jax.experimental import pallas as pl
from jax.experimental.pallas import tpu as pltpu


def _mlp_kernel(x_ref, w1_ref, w3_ref, w2_ref, o_ref, acc_ref):
    """One (token-tile, intermediate-tile) grid step.

    x_ref   : (TM, H)       activations (bf16 or f32), resident across k
    w1_ref  : (H, TI)       gate-projection tile k
    w3_ref  : (H, TI)       up-projection tile k
    w2_ref  : (TI, H)       down-projection tile k
    o_ref   : (TM, H)       output tile (written on last k step)
    acc_ref : (TM, H) f32   VMEM accumulator, persists across the k axis
    """
    k = pl.program_id(1)

    @pl.when(k == 0)
    def _():
        acc_ref[...] = jnp.zeros_like(acc_ref)

    x = x_ref[...]                                                      # (TM, H)

    # Gate and up projections, f32 accumulation on the MXU.
    h1 = jnp.dot(x, w1_ref[...], preferred_element_type=jnp.float32)   # (TM, TI)
    h3 = jnp.dot(x, w3_ref[...], preferred_element_type=jnp.float32)   # (TM, TI)

    # SiLU gating in f32 (sigmoid -> EUP), then down-projection partial sum.
    gated = (h1 * jax.nn.sigmoid(h1)) * h3                              # (TM, TI) f32
    acc_ref[...] += jnp.dot(gated.astype(w2_ref.dtype), w2_ref[...],
                            preferred_element_type=jnp.float32)         # (TM, H)

    @pl.when(k == pl.num_programs(1) - 1)
    def _():
        o_ref[...] = acc_ref[...].astype(o_ref.dtype)


@functools.partial(jax.jit,
                   static_argnames=("token_tile", "inter_tile", "vmem_limit_bytes"))
def mixtral_expert_mlp(x, w1_t, w3_t, w2_t, *,
                       token_tile=128, inter_tile=512,
                       vmem_limit_bytes=48 * 1024 * 1024):
    """x: (T, H); w1_t/w3_t: (H, I); w2_t: (I, H). Returns (T, H) in x.dtype."""
    T, H = x.shape
    I = w1_t.shape[1]

    tm = min(token_tile, T)
    ti = min(inter_tile, I)
    assert T % tm == 0, "token count must be divisible by token tile"
    assert I % ti == 0, "intermediate dim must be divisible by intermediate tile"
    assert tm % 16 == 0, "token tile must be a multiple of 16 (bf16 sublane packing)"
    assert ti % 128 == 0, "intermediate tile must be a multiple of 128 lanes"
    assert H % 128 == 0, "hidden dim must be a multiple of 128 lanes"

    grid = (T // tm, I // ti)

    return pl.pallas_call(
        _mlp_kernel,
        out_shape=jax.ShapeDtypeStruct((T, H), x.dtype),
        grid_spec=pltpu.PrefetchScalarGridSpec(
            num_scalar_prefetch=0,
            grid=grid,
            in_specs=[
                pl.BlockSpec((tm, H), lambda i, k: (i, 0)),    # x tile (resident across k)
                pl.BlockSpec((H, ti), lambda i, k: (0, k)),    # w1 tile k (gate)
                pl.BlockSpec((H, ti), lambda i, k: (0, k)),    # w3 tile k (up)
                pl.BlockSpec((ti, H), lambda i, k: (k, 0)),    # w2 tile k (down)
            ],
            out_specs=pl.BlockSpec((tm, H), lambda i, k: (i, 0)),  # written on last k
            scratch_shapes=[pltpu.VMEM((tm, H), jnp.float32)],     # f32 accumulator
        ),
        compiler_params=pltpu.CompilerParams(
            dimension_semantics=("parallel", "arbitrary"),
            vmem_limit_bytes=vmem_limit_bytes,
        ),
    )(x, w1_t, w3_t, w2_t)


def reference_mlp(x, w1_t, w3_t, w2_t):
    """Pure-JAX reference mirroring the kernel's precision policy."""
    h1 = jnp.dot(x, w1_t, preferred_element_type=jnp.float32)
    h3 = jnp.dot(x, w3_t, preferred_element_type=jnp.float32)
    gated = (h1 * jax.nn.sigmoid(h1)) * h3
    out = jnp.dot(gated.astype(w2_t.dtype), w2_t, preferred_element_type=jnp.float32)
    return out.astype(x.dtype)


if __name__ == "__main__":
    # Small, MXU/tile-aligned synthetic shapes (Mixtral-style: hidden < intermediate).
    tokens, hidden, intermediate = 256, 128, 512
    dtype = jnp.bfloat16

    key = jax.random.PRNGKey(0)
    kx, k1, k2, k3 = jax.random.split(key, 4)

    # Build in f32, quantize once to bf16 so kernel and reference see identical inputs.
    x = jax.random.normal(kx, (tokens, hidden), dtype=jnp.float32).astype(dtype)
    w1_t = (jax.random.normal(k1, (hidden, intermediate), dtype=jnp.float32) * 0.02).astype(dtype)
    w3_t = (jax.random.normal(k3, (hidden, intermediate), dtype=jnp.float32) * 0.02).astype(dtype)
    w2_t = (jax.random.normal(k2, (intermediate, hidden), dtype=jnp.float32) * 0.02).astype(dtype)

    out = mixtral_expert_mlp(x, w1_t, w3_t, w2_t, token_tile=128, inter_tile=256)
    out = jax.block_until_ready(out)

    ref = reference_mlp(x, w1_t, w3_t, w2_t)
    assert out.shape == (tokens, hidden)
    assert out.dtype == dtype
    err = jnp.max(jnp.abs(out.astype(jnp.float32) - ref.astype(jnp.float32)))
    assert jnp.allclose(out.astype(jnp.float32), ref.astype(jnp.float32),
                        atol=5e-3, rtol=5e-2), f"mismatch vs reference (max abs err {err})"

    print("KERNEL_OK")
</pallas_src>

<mosaic_0001>
module attributes {stable_mosaic.version = 11 : i64} {
  func.func @_mlp_kernel(%arg0: i32, %arg1: i32, %arg2: memref<128x128xbf16, #tpu.memory_space<vmem>>, %arg3: memref<128x256xbf16, #tpu.memory_space<vmem>>, %arg4: memref<128x256xbf16, #tpu.memory_space<vmem>>, %arg5: memref<256x128xbf16, #tpu.memory_space<vmem>>, %arg6: memref<128x128xbf16, #tpu.memory_space<vmem>>, %arg7: memref<128x128xf32, #tpu.memory_space<vmem>>) attributes {dimension_semantics = [#tpu.dimension_semantics<parallel>, #tpu.dimension_semantics<arbitrary>], iteration_bounds = array<i64: 2, 2>, scalar_prefetch = 0 : i64, scratch_operands = 1 : i64, tpu.core_type = #tpu.core_type<tc>, window_params = [{transform_indices = @transform_0, window_bounds = array<i64: 128, 128>}, {transform_indices = @transform_1, window_bounds = array<i64: 128, 256>}, {transform_indices = @transform_2, window_bounds = array<i64: 128, 256>}, {transform_indices = @transform_3, window_bounds = array<i64: 256, 128>}, {transform_indices = @transform_4, window_bounds = array<i64: 128, 128>}]} {
    %c0_i32 = arith.constant 0 : i32
    %0 = arith.cmpi eq, %arg1, %c0_i32 : i32
    %1 = arith.extui %0 : i1 to i32
    %c0_i32_0 = arith.constant 0 : i32
    %2 = arith.cmpi ne, %1, %c0_i32_0 : i32
    scf.if %2 {
      %cst_16 = arith.constant 0.000000e+00 : f32
      %24 = vector.broadcast %cst_16 : f32 to vector<128x128xf32>
      %c0_17 = arith.constant 0 : index
      %c0_18 = arith.constant 0 : index
      %25 = vector.load %arg7[%c0_17, %c0_18] : memref<128x128xf32, #tpu.memory_space<vmem>>, vector<128x128xf32>
      tpu.vector_store %arg7[%c0_17, %c0_18], %24 {strides = array<i32>} : memref<128x128xf32, #tpu.memory_space<vmem>>, vector<128x128xf32>,
    } else {
    }
    %c0 = arith.constant 0 : index
    %c0_1 = arith.constant 0 : index
    %3 = vector.load %arg2[%c0, %c0_1] : memref<128x128xbf16, #tpu.memory_space<vmem>>, vector<128x128xbf16>
    %c0_2 = arith.constant 0 : index
    %c0_3 = arith.constant 0 : index
    %4 = vector.load %arg3[%c0_2, %c0_3] : memref<128x256xbf16, #tpu.memory_space<vmem>>, vector<128x256xbf16>
    %cst = arith.constant dense<0.000000e+00> : vector<128x256xf32>
    %5 = tpu.matmul %3, %4, %cst {dimension_numbers = #tpu.dot_dimension_numbers<[1], [0], [0], [1], [0, 0, 1, 1], [], []>} : vector<128x128xbf16>, vector<128x256xbf16>, vector<128x256xf32> -> vector<128x256xf32>
    %c0_4 = arith.constant 0 : index
    %c0_5 = arith.constant 0 : index
    %6 = vector.load %arg4[%c0_4, %c0_5] : memref<128x256xbf16, #tpu.memory_space<vmem>>, vector<128x256xbf16>
    %cst_6 = arith.constant dense<0.000000e+00> : vector<128x256xf32>
    %7 = tpu.matmul %3, %6, %cst_6 {dimension_numbers = #tpu.dot_dimension_numbers<[1], [0], [0], [1], [0, 0, 1, 1], [], []>} : vector<128x128xbf16>, vector<128x256xbf16>, vector<128x256xf32> -> vector<128x256xf32>
    %8 = arith.negf %5 : vector<128x256xf32>
    %9 = math.exp %8 : vector<128x256xf32>
    %cst_7 = arith.constant 1.000000e+00 : f32
    %10 = vector.broadcast %cst_7 : f32 to vector<128x256xf32>
    %11 = arith.addf %10, %9 : vector<128x256xf32>
    %12 = arith.divf %10, %11 : vector<128x256xf32>
    %13 = arith.mulf %5, %12 : vector<128x256xf32>
    %14 = arith.mulf %13, %7 : vector<128x256xf32>
    %c0_8 = arith.constant 0 : index
    %c0_9 = arith.constant 0 : index
    %15 = vector.load %arg7[%c0_8, %c0_9] : memref<128x128xf32, #tpu.memory_space<vmem>>, vector<128x128xf32>
    %16 = arith.truncf %14 : vector<128x256xf32> to vector<128x256xbf16>
    %c0_10 = arith.constant 0 : index
    %c0_11 = arith.constant 0 : index
    %17 = vector.load %arg5[%c0_10, %c0_11] : memref<256x128xbf16, #tpu.memory_space<vmem>>, vector<256x128xbf16>
    %cst_12 = arith.constant dense<0.000000e+00> : vector<128x128xf32>
    %18 = tpu.matmul %16, %17, %cst_12 {dimension_numbers = #tpu.dot_dimension_numbers<[1], [0], [0], [1], [0, 0, 1, 1], [], []>} : vector<128x256xbf16>, vector<256x128xbf16>, vector<128x128xf32> -> vector<128x128xf32>
    %19 = arith.addf %15, %18 : vector<128x128xf32>
    %c0_13 = arith.constant 0 : index
    %c0_14 = arith.constant 0 : index
    %20 = vector.load %arg7[%c0_13, %c0_14] : memref<128x128xf32, #tpu.memory_space<vmem>>, vector<128x128xf32>
    tpu.vector_store %arg7[%c0_13, %c0_14], %19 {strides = array<i32>} : memref<128x128xf32, #tpu.memory_space<vmem>>, vector<128x128xf32>,
    %c1_i32 = arith.constant 1 : i32
    %21 = arith.cmpi eq, %arg1, %c1_i32 : i32
    %22 = arith.extui %21 : i1 to i32
    %c0_i32_15 = arith.constant 0 : i32
    %23 = arith.cmpi ne, %22, %c0_i32_15 : i32
    scf.if %23 {
      %c0_16 = arith.constant 0 : index
      %c0_17 = arith.constant 0 : index
      %24 = vector.load %arg7[%c0_16, %c0_17] : memref<128x128xf32, #tpu.memory_space<vmem>>, vector<128x128xf32>
      %25 = arith.truncf %24 : vector<128x128xf32> to vector<128x128xbf16>
      %c0_18 = arith.constant 0 : index
      %c0_19 = arith.constant 0 : index
      %26 = vector.load %arg6[%c0_18, %c0_19] : memref<128x128xbf16, #tpu.memory_space<vmem>>, vector<128x128xbf16>
      tpu.vector_store %arg6[%c0_18, %c0_19], %25 {strides = array<i32>} : memref<128x128xbf16, #tpu.memory_space<vmem>>, vector<128x128xbf16>,
    } else {
    }
    return
  }
  func.func @transform_0(%arg0: i32, %arg1: i32) -> (i32, i32) {
    %c0_i32 = arith.constant 0 : i32
    %c0_i32_0 = arith.constant 0 : i32
    return %arg0, %c0_i32 : i32, i32
  }
  func.func @transform_1(%arg0: i32, %arg1: i32) -> (i32, i32) {
    %c0_i32 = arith.constant 0 : i32
    %c0_i32_0 = arith.constant 0 : i32
    return %c0_i32, %arg1 : i32, i32
  }
  func.func @transform_2(%arg0: i32, %arg1: i32) -> (i32, i32) {
    %c0_i32 = arith.constant 0 : i32
    %c0_i32_0 = arith.constant 0 : i32
    return %c0_i32, %arg1 : i32, i32
  }
  func.func @transform_3(%arg0: i32, %arg1: i32) -> (i32, i32) {
    %c0_i32 = arith.constant 0 : i32
    %c0_i32_0 = arith.constant 0 : i32
    return %arg1, %c0_i32 : i32, i32
  }
  func.func @transform_4(%arg0: i32, %arg1: i32) -> (i32, i32) {
    %c0_i32 = arith.constant 0 : i32
    %c0_i32_0 = arith.constant 0 : i32
    return %arg0, %c0_i32 : i32, i32
  }
}

</mosaic_0001>

<llo_original>
// kernel: mixtral_expert_mlp.1
$region0: #{mixtral_expert_mlp.1}
  #allocation0 [shape = 'u32[]', space=smem, size = 0x4, offset = 0x4, fixed_abs, tag = 'smem constant byte address 0x4 - core index']
  #allocation1 [shape = 'u32[144,128]{1,0:T(1,128)}', space=vmem, size = 0x12000, scoped, tag = 'internal scratch']
  #allocation2 [shape = 'f32[128,128]{1,0:T(8,128)}', space=vmem, size = 0x10000, scoped, tag = 'scratch operand']
  %s0 = inlined_call_operand.hbm [shape: bf16[256,128], index: 0, kind: input, shape index: {}]
  %s1 = inlined_call_operand.hbm [shape: bf16[128,512], index: 1, kind: input, shape index: {}]
  %s2 = inlined_call_operand.hbm [shape: bf16[128,512], index: 2, kind: input, shape index: {}]
  %s3 = inlined_call_operand.hbm [shape: bf16[512,128], index: 3, kind: input, shape index: {}]
  %s4 = inlined_call_operand.hbm [shape: bf16[256,128], index: 4, kind: output, shape index: {}]
  %s5 = sld [smem:[#allocation0]]
  $region73: #{mixtral_expert_mlp.1} parent=0
    _
  %s7 = ssub.s32 1, %s5
  %s8 = scalar_select 0, %s7, %s5
  $region1: #{mixtral_expert_mlp.1} parent=0
    #allocation3 [shape = 'u8[65536]{0}', space=vmem, size = 0x10000, scoped, tag = 'input window, operand 0']
    #allocation4 [shape = 's32[2]{0}', space=sflag, size = 0x8, scoped, tag = 'scoped memory for mixtral_expert_mlp.1']
    #allocation5 [shape = 's32[2]{0}', space=sflag, size = 0x8, scoped, tag = 'scoped memory for mixtral_expert_mlp.1']
    #allocation6 [shape = 'u8[131072]{0}', space=vmem, size = 0x20000, scoped, tag = 'input window, operand 1']
    #allocation7 [shape = 's32[2]{0}', space=sflag, size = 0x8, scoped, tag = 'scoped memory for mixtral_expert_mlp.1']
    #allocation8 [shape = 'u8[131072]{0}', space=vmem, size = 0x20000, scoped, tag = 'input window, operand 2']
    #allocation9 [shape = 'u8[131072]{0}', space=vmem, size = 0x20000, scoped, tag = 'input window, operand 3']
    #allocation10 [shape = 's32[2]{0}', space=sflag, size = 0x8, scoped, tag = 'scoped memory for mixtral_expert_mlp.1']
    #allocation11 [shape = 'u8[65536]{0}', space=vmem, size = 0x10000, scoped, tag = 'output window, operand 0']
    %9 = vsyncpa [#allocation4], 0
    %s10 = scalar_lea.sflag [#allocation4], 1
    %11 = vsyncpa %s10, 0
    %12 = vsyncpa [#allocation7], 0
    %s13 = scalar_lea.sflag [#allocation7], 1
    %14 = vsyncpa %s13, 0
    %15 = vsyncpa [#allocation10], 0
    %s16 = scalar_lea.sflag [#allocation10], 1
    %17 = vsyncpa %s16, 0
    %18 = vsyncpa [#allocation5], 0
    %s19 = scalar_lea.sflag [#allocation5], 1
    %20 = vsyncpa %s19, 0
    loop: start=0, step=1, limit=6
    $region2: #{mixtral_expert_mlp.1} parent=1 // loop_pre_header
      _
    $region3: #{mixtral_expert_mlp.1} parent=1 // loop_header
      %s22 = sphi 0, %s26
      %p23 = scmp.ge.s32.totalorder %s22, 6
      %s29 = sphi 0, %s41
      %s30 = sphi 0, %s37
      %s31 = sphi 0, %s29
      %s32 = sphi 0, %s30
      %s33 = sphi 0, %s31
      %s34 = sphi 0, %s32
      %s44 = sphi 0, %s46
      %s47 = sphi 0, %s44
      %s48 = sphi 0, %s47
      %s64 = sphi 0, %s48
      %s70 = sphi 0, %s72
      %s73 = sphi 0, %s70
      %s74 = sphi 0, %s73
      %s90 = sphi 0, %s74
      %s96 = sphi 0, %s98
      %s99 = sphi 0, %s96
      %s100 = sphi 0, %s99
      %s116 = sphi 0, %s100
      %s122 = sphi 0, %s124
      %s125 = sphi 0, %s122
      %s126 = sphi 0, %s125
      %s142 = sphi 0, %s126
      %s148 = sphi 0, %s150
      %s151 = sphi 0, %s148
      %s152 = sphi 0, %s151
      %s168 = sphi 0, %s152
    $region4: #{mixtral_expert_mlp.1} parent=1 // loop_header_branch
      %25 = sbr.rel (%p23) target = $region8
    $region5: #{mixtral_expert_mlp.1} parent=1 // loop_body
      %s27 = ssub.s32 %s22, 1
      %s28 = ssub.s32 %s22, 2
      %s35 = sadd.s32 1, %s30
      %p36 = scmp.ge.s32.totalorder %s35, 2
      %s37 = scalar_select %p36, 0, %s35
      %s38 = sadd.s32 1, %s29
      %s39 = scalar_select %p36, %s38, %s29
      %p40 = scmp.ge.s32.totalorder %s39, 2
      %s41 = scalar_select %p40, 0, %s39
      %s42 = ssub.s32 %s29, %s41
      %p43 = scmp.eq.s32.totalorder %s42, 0
      %s45 = sadd.s32 %s44, 1
      %s46 = scalar_select %p43, %s44, %s45
      %p49 = pneg %p43
      %p50 = scmp.eq.s32.totalorder %s22, 3
      %p51 = por %p49, %p50
      %p52 = scmp.ne.s32.totalorder %s44, %s47
      %p53 = scmp.eq.s32.totalorder %s22, 0
      %p54 = por %p52, %p53
      %p55 = scmp.ne.s32.totalorder %s44, %s47
      %p56 = scmp.eq.s32.totalorder %s27, 3
      %p57 = por %p55, %p56
      %p58 = scmp.ne.s32.totalorder %s47, %s48
      %p59 = scmp.eq.s32.totalorder %s27, 0
      %p60 = por %p58, %p59
      %p61 = scmp.ne.s32.totalorder %s47, %s48
      %p62 = scmp.eq.s32.totalorder %s28, 3
      %p63 = por %p61, %p62
      %p65 = scmp.ne.s32.totalorder %s48, %s64
      %p66 = scmp.eq.s32.totalorder %s28, 0
      %p67 = por %p65, %p66
      %s68 = ssub.s32 %s30, %s37
      %p69 = scmp.eq.s32.totalorder %s68, 0
      %s71 = sadd.s32 %s70, 1
      %s72 = scalar_select %p69, %s70, %s71
      %p75 = pneg %p69
      %p76 = scmp.eq.s32.totalorder %s22, 3
      %p77 = por %p75, %p76
      %p78 = scmp.ne.s32.totalorder %s70, %s73
      %p79 = scmp.eq.s32.totalorder %s22, 0
      %p80 = por %p78, %p79
      %p81 = scmp.ne.s32.totalorder %s70, %s73
      %p82 = scmp.eq.s32.totalorder %s27, 3
      %p83 = por %p81, %p82
      %p84 = scmp.ne.s32.totalorder %s73, %s74
      %p85 = scmp.eq.s32.totalorder %s27, 0
      %p86 = por %p84, %p85
      %p87 = scmp.ne.s32.totalorder %s73, %s74
      %p88 = scmp.eq.s32.totalorder %s28, 3
      %p89 = por %p87, %p88
      %p91 = scmp.ne.s32.totalorder %s74, %s90
      %p92 = scmp.eq.s32.totalorder %s28, 0
      %p93 = por %p91, %p92
      %s94 = ssub.s32 %s30, %s37
      %p95 = scmp.eq.s32.totalorder %s94, 0
      %s97 = sadd.s32 %s96, 1
      %s98 = scalar_select %p95, %s96, %s97
      %p101 = pneg %p95
      %p102 = scmp.eq.s32.totalorder %s22, 3
      %p103 = por %p101, %p102
      %p104 = scmp.ne.s32.totalorder %s96, %s99
      %p105 = scmp.eq.s32.totalorder %s22, 0
      %p106 = por %p104, %p105
      %p107 = scmp.ne.s32.totalorder %s96, %s99
      %p108 = scmp.eq.s32.totalorder %s27, 3
      %p109 = por %p107, %p108
      %p110 = scmp.ne.s32.totalorder %s99, %s100
      %p111 = scmp.eq.s32.totalorder %s27, 0
      %p112 = por %p110, %p111
      %p113 = scmp.ne.s32.totalorder %s99, %s100
      %p114 = scmp.eq.s32.totalorder %s28, 3
      %p115 = por %p113, %p114
      %p117 = scmp.ne.s32.totalorder %s100, %s116
      %p118 = scmp.eq.s32.totalorder %s28, 0
      %p119 = por %p117, %p118
      %s120 = ssub.s32 %s30, %s37
      %p121 = scmp.eq.s32.totalorder %s120, 0
      %s123 = sadd.s32 %s122, 1
      %s124 = scalar_select %p121, %s122, %s123
      %p127 = pneg %p121
      %p128 = scmp.eq.s32.totalorder %s22, 3
      %p129 = por %p127, %p128
      %p130 = scmp.ne.s32.totalorder %s122, %s125
      %p131 = scmp.eq.s32.totalorder %s22, 0
      %p132 = por %p130, %p131
      %p133 = scmp.ne.s32.totalorder %s122, %s125
      %p134 = scmp.eq.s32.totalorder %s27, 3
      %p135 = por %p133, %p134
      %p136 = scmp.ne.s32.totalorder %s125, %s126
      %p137 = scmp.eq.s32.totalorder %s27, 0
      %p138 = por %p136, %p137
      %p139 = scmp.ne.s32.totalorder %s125, %s126
      %p140 = scmp.eq.s32.totalorder %s28, 3
      %p141 = por %p139, %p140
      %p143 = scmp.ne.s32.totalorder %s126, %s142
      %p144 = scmp.eq.s32.totalorder %s28, 0
      %p145 = por %p143, %p144
      %s146 = ssub.s32 %s29, %s41
      %p147 = scmp.eq.s32.totalorder %s146, 0
      %s149 = sadd.s32 %s148, 1
      %s150 = scalar_select %p147, %s148, %s149
      %p153 = pneg %p147
      %p154 = scmp.eq.s32.totalorder %s22, 3
      %p155 = por %p153, %p154
      %p156 = scmp.ne.s32.totalorder %s148, %s151
      %p157 = scmp.eq.s32.totalorder %s22, 0
      %p158 = por %p156, %p157
      %p159 = scmp.ne.s32.totalorder %s148, %s151
      %p160 = scmp.eq.s32.totalorder %s27, 3
      %p161 = por %p159, %p160
      %p162 = scmp.ne.s32.totalorder %s151, %s152
      %p163 = scmp.eq.s32.totalorder %s27, 0
      %p164 = por %p162, %p163
      %p165 = scmp.ne.s32.totalorder %s151, %s152
      %p166 = scmp.eq.s32.totalorder %s28, 3
      %p167 = por %p165, %p166
      %p169 = scmp.ne.s32.totalorder %s152, %s168
      %p170 = scmp.eq.s32.totalorder %s28, 0
      %p171 = por %p169, %p170
      %p172 = scmp.le.s32.totalorder 1, %s22
      %p173 = scmp.lt.s32.totalorder %s22, 5
      %p174 = pnand %p172, %p173
      %p175 = pneg %p174
      // Predicated region
      $region9: #{mixtral_expert_mlp.1} parent=5 // pred_check
        _
      $region10: #{mixtral_expert_mlp.1} parent=5 // pred_check_branch
        %177 = sbr.rel (%p174) target = $region12
      $region11: #{mixtral_expert_mlp.1} parent=5 // pred_region
        %s178 = ssub.s32 %s22, 1
      $region12: #{mixtral_expert_mlp.1} parent=5 // pred_fallthru
        _
      %p179 = scmp.lt.s32.totalorder %s22, 4
      // Predicated region
      $region13: #{mixtral_expert_mlp.1} parent=5 // pred_check
        %p180 = pneg %p179
      $region14: #{mixtral_expert_mlp.1} parent=5 // pred_check_branch
        %182 = sbr.rel (%p180) target = $region16
      $region15: #{mixtral_expert_mlp.1} parent=5 // pred_region
        // Predicated region
        $region17: #{mixtral_expert_mlp.1} parent=15 // pred_check
          %p183 = pneg %p54
        $region18: #{mixtral_expert_mlp.1} parent=15 // pred_check_branch
          %185 = sbr.rel (%p183) target = $region20
        $region19: #{mixtral_expert_mlp.1} parent=15 // pred_region
          %s186 = sand.u32 %s44, 1
          %s187 = scalar_lea.sflag [#allocation4], %s186
          %s188 = sand.u32 %s44, 1
          %s189 = smul.addr %s188, 64
          %s190 = scalar_lea.vmem [#allocation3], %s189
          %s191 = smul.u32 16, %s29
          %s193 = ssub.s32 1024, 1024
          %194 = vsyncadd %s187, %s193
          %s195 = smul.addr %s191, 64
          %s196 = scalar_lea.hbm %s0, %s195
          %s197 = sshll.u32 %s190, 4
          %s198 = int_to_ptr.vmem [resolvable:$true] %s197
          %203 = dma.hbm_to_vmem [thread:$0]  %s196, 1024, %s198, %s187, 64, 64, 4
        $region20: #{mixtral_expert_mlp.1} parent=15 // pred_fallthru
          _
        // Predicated region
        $region21: #{mixtral_expert_mlp.1} parent=15 // pred_check
          %p204 = pneg %p80
        $region22: #{mixtral_expert_mlp.1} parent=15 // pred_check_branch
          %206 = sbr.rel (%p204) target = $region24
        $region23: #{mixtral_expert_mlp.1} parent=15 // pred_region
          %s207 = sand.u32 %s22, 1
          %s208 = scalar_lea.sflag [#allocation7], %s207
          %s209 = sand.u32 %s70, 1
          %s210 = smul.addr %s209, 128
          %s211 = scalar_lea.vmem [#allocation6], %s210
          %s212 = smul.u32 2, %s30
          %s214 = ssub.s32 2048, 2048
          %215 = vsyncadd %s208, %s214
          %s216 = smul.addr %s212, 64
          %s217 = scalar_lea.hbm %s1, %s216
          %s218 = sshll.u32 %s211, 4
          %s219 = int_to_ptr.vmem [resolvable:$true] %s218
          %224 = dma.hbm_to_vmem [thread:$0]  %s217, 2048, %s219, %s208, 256, 128, 8
        $region24: #{mixtral_expert_mlp.1} parent=15 // pred_fallthru
          _
        // Predicated region
        $region25: #{mixtral_expert_mlp.1} parent=15 // pred_check
          %p225 = pneg %p106
        $region26: #{mixtral_expert_mlp.1} parent=15 // pred_check_branch
          %227 = sbr.rel (%p225) target = $region28
        $region27: #{mixtral_expert_mlp.1} parent=15 // pred_region
          %s228 = sand.u32 %s22, 1
          %s229 = scalar_lea.sflag [#allocation7], %s228
          %s230 = sand.u32 %s96, 1
          %s231 = smul.addr %s230, 128
          %s232 = scalar_lea.vmem [#allocation8], %s231
          %s233 = smul.u32 2, %s30
          %s235 = ssub.s32 2048, 2048
          %236 = vsyncadd %s229, %s235
          %s237 = smul.addr %s233, 64
          %s238 = scalar_lea.hbm %s2, %s237
          %s239 = sshll.u32 %s232, 4
          %s240 = int_to_ptr.vmem [resolvable:$true] %s239
          %245 = dma.hbm_to_vmem [thread:$0]  %s238, 2048, %s240, %s229, 256, 128, 8
        $region28: #{mixtral_expert_mlp.1} parent=15 // pred_fallthru
          _
        // Predicated region
        $region29: #{mixtral_expert_mlp.1} parent=15 // pred_check
          %p246 = pneg %p132
        $region30: #{mixtral_expert_mlp.1} parent=15 // pred_check_branch
          %248 = sbr.rel (%p246) target = $region32
        $region31: #{mixtral_expert_mlp.1} parent=15 // pred_region
          %s249 = sand.u32 %s122, 1
          %s250 = scalar_lea.sflag [#allocation10], %s249
          %s251 = sand.u32 %s122, 1
          %s252 = smul.addr %s251, 128
          %s253 = scalar_lea.vmem [#allocation9], %s252
          %s254 = smul.u32 32, %s30
          %s256 = ssub.s32 2048, 2048
          %257 = vsyncadd %s250, %s256
          %s258 = smul.addr %s254, 64
          %s259 = scalar_lea.hbm %s3, %s258
          %s260 = sshll.u32 %s253, 4
          %s261 = int_to_ptr.vmem [resolvable:$true] %s260
          %266 = dma.hbm_to_vmem [thread:$0]  %s259, 2048, %s261, %s250, 64, 64, 4
        $region32: #{mixtral_expert_mlp.1} parent=15 // pred_fallthru
          _
      $region16: #{mixtral_expert_mlp.1} parent=5 // pred_fallthru
        _
      %p267 = scmp.le.s32.totalorder 1, %s22
      %p268 = scmp.lt.s32.totalorder %s22, 5
      %p269 = pnand %p267, %p268
      %p270 = pneg %p269
      // Predicated region
      $region33: #{mixtral_expert_mlp.1} parent=5 // pred_check
        _
      $region34: #{mixtral_expert_mlp.1} parent=5 // pred_check_branch
        %272 = sbr.rel (%p269) target = $region36
      $region35: #{mixtral_expert_mlp.1} parent=5 // pred_region
        %s273 = ssub.s32 %s22, 1
        %s274 = sand.u32 %s47, 1
        %s275 = scalar_lea.sflag [#allocation4], %s274
        %s276 = sand.u32 %s47, 1
        %s277 = smul.addr %s276, 64
        %s278 = scalar_lea.vmem [#allocation3], %s277
        // Predicated region
        $region37: #{mixtral_expert_mlp.1} parent=35 // pred_check
          %p279 = pneg %p60
        $region38: #{mixtral_expert_mlp.1} parent=35 // pred_check_branch
          %281 = sbr.rel (%p279) target = $region40
        $region39: #{mixtral_expert_mlp.1} parent=35 // pred_region
          %282 = dma.done %s275, 1024
        $region40: #{mixtral_expert_mlp.1} parent=35 // pred_fallthru
          _
        %s283 = sand.u32 %s27, 1
        %s284 = scalar_lea.sflag [#allocation7], %s283
        %s285 = sand.u32 %s73, 1
        %s286 = smul.addr %s285, 128
        %s287 = scalar_lea.vmem [#allocation6], %s286
        // Predicated region
        $region41: #{mixtral_expert_mlp.1} parent=35 // pred_check
          %p288 = pneg %p86
        $region42: #{mixtral_expert_mlp.1} parent=35 // pred_check_branch
          %290 = sbr.rel (%p288) target = $region44
        $region43: #{mixtral_expert_mlp.1} parent=35 // pred_region
          %291 = dma.done %s284, 2048
        $region44: #{mixtral_expert_mlp.1} parent=35 // pred_fallthru
          _
        %s292 = sand.u32 %s27, 1
        %s293 = scalar_lea.sflag [#allocation7], %s292
        %s294 = sand.u32 %s99, 1
        %s295 = smul.addr %s294, 128
        %s296 = scalar_lea.vmem [#allocation8], %s295
        // Predicated region
        $region45: #{mixtral_expert_mlp.1} parent=35 // pred_check
          %p297 = pneg %p112
        $region46: #{mixtral_expert_mlp.1} parent=35 // pred_check_branch
          %299 = sbr.rel (%p297) target = $region48
        $region47: #{mixtral_expert_mlp.1} parent=35 // pred_region
          %300 = dma.done %s293, 2048
        $region48: #{mixtral_expert_mlp.1} parent=35 // pred_fallthru
          _
        %s301 = sand.u32 %s125, 1
        %s302 = scalar_lea.sflag [#allocation10], %s301
        %s303 = sand.u32 %s125, 1
        %s304 = smul.addr %s303, 128
        %s305 = scalar_lea.vmem [#allocation9], %s304
        // Predicated region
        $region49: #{mixtral_expert_mlp.1} parent=35 // pred_check
          %p306 = pneg %p138
        $region50: #{mixtral_expert_mlp.1} parent=35 // pred_check_branch
          %308 = sbr.rel (%p306) target = $region52
        $region51: #{mixtral_expert_mlp.1} parent=35 // pred_region
          %309 = dma.done %s302, 2048
        $region52: #{mixtral_expert_mlp.1} parent=35 // pred_fallthru
          _
        %s310 = sand.u32 %s47, 1
        %s311 = scalar_lea.sflag [#allocation4], %s310
        %s312 = sand.u32 %s47, 1
        %s313 = smul.addr %s312, 64
        %s314 = scalar_lea.vmem [#allocation3], %s313
        %p315 = pneg %p60
        %p316 = pneg %p57
        %s317 = sand.u32 %s27, 1
        %s318 = scalar_lea.sflag [#allocation7], %s317
        %s319 = sand.u32 %s73, 1
        %s320 = smul.addr %s319, 128
        %s321 = scalar_lea.vmem [#allocation6], %s320
        %p322 = pneg %p86
        %p323 = pneg %p83
        %s324 = sand.u32 %s27, 1
        %s325 = scalar_lea.sflag [#allocation7], %s324
        %s326 = sand.u32 %s99, 1
        %s327 = smul.addr %s326, 128
        %s328 = scalar_lea.vmem [#allocation8], %s327
        %p329 = pneg %p112
        %p330 = pneg %p109
        %s331 = sand.u32 %s125, 1
        %s332 = scalar_lea.sflag [#allocation10], %s331
        %s333 = sand.u32 %s125, 1
        %s334 = smul.addr %s333, 128
        %s335 = scalar_lea.vmem [#allocation9], %s334
        %p336 = pneg %p138
        %p337 = pneg %p135
        %p338 = pneg %p164
        %p339 = pneg %p161
        %s340 = sand.u32 %s151, 1
        %s341 = scalar_lea.sflag [#allocation5], %s340
        %s342 = sand.u32 %s151, 1
        %s343 = smul.addr %s342, 64
        %s344 = scalar_lea.vmem [#allocation11], %s343
        %s345 = smul.u32 16, %s31
        %s346 = smul.u32 2, %s32
        %s347 = smul.u32 2, %s32
        %s348 = smul.u32 32, %s32
        %s349 = smul.u32 16, %s31
        %p351 = scmp.eq.s32.totalorder %s32, 0
        // Predicated region
        $region53: #{mixtral_expert_mlp.1} parent=35 // pred_check
          %p352 = pneg %p351
        $region54: #{mixtral_expert_mlp.1} parent=35 // pred_check_branch
          %354 = sbr.rel (%p352) target = $region56
        $region55: #{mixtral_expert_mlp.1} parent=35 // pred_region
          %355 = vst [vmem:[#allocation2] sm:$0xff] 0.0
          %356 = vst [vmem:[#allocation2 + $0x8] sm:$0xff] 0.0
          %357 = vst [vmem:[#allocation2 + $0x10] sm:$0xff] 0.0
          %358 = vst [vmem:[#allocation2 + $0x18] sm:$0xff] 0.0
          %359 = vst [vmem:[#allocation2 + $0x20] sm:$0xff] 0.0
          %360 = vst [vmem:[#allocation2 + $0x28] sm:$0xff] 0.0
          %361 = vst [vmem:[#allocation2 + $0x30] sm:$0xff] 0.0
          %362 = vst [vmem:[#allocation2 + $0x38] sm:$0xff] 0.0
          %363 = vst [vmem:[#allocation2 + $0x40] sm:$0xff] 0.0
          %364 = vst [vmem:[#allocation2 + $0x48] sm:$0xff] 0.0
          %365 = vst [vmem:[#allocation2 + $0x50] sm:$0xff] 0.0
          %366 = vst [vmem:[#allocation2 + $0x58] sm:$0xff] 0.0
          %367 = vst [vmem:[#allocation2 + $0x60] sm:$0xff] 0.0
          %368 = vst [vmem:[#allocation2 + $0x68] sm:$0xff] 0.0
          %369 = vst [vmem:[#allocation2 + $0x70] sm:$0xff] 0.0
          %370 = vst [vmem:[#allocation2 + $0x78] sm:$0xff] 0.0
        $region56: #{mixtral_expert_mlp.1} parent=35 // pred_fallthru
          _
        %v371 = vld [vmem:[%s278] sm:$0xf]
        %v372 = vld [vmem:[%s278 + $0x4] sm:$0xf]
        %v373 = vld [vmem:[%s278 + $0x8] sm:$0xf]
        %v374 = vld [vmem:[%s278 + $0xc] sm:$0xf]
        %v375 = vld [vmem:[%s278 + $0x10] sm:$0xf]
        %v376 = vld [vmem:[%s278 + $0x14] sm:$0xf]
        %v377 = vld [vmem:[%s278 + $0x18] sm:$0xf]
        %v378 = vld [vmem:[%s278 + $0x1c] sm:$0xf]
        %v379 = vld [vmem:[%s278 + $0x20] sm:$0xf]
        %v380 = vld [vmem:[%s278 + $0x24] sm:$0xf]
        %v381 = vld [vmem:[%s278 + $0x28] sm:$0xf]
        %v382 = vld [vmem:[%s278 + $0x2c] sm:$0xf]
        %v383 = vld [vmem:[%s278 + $0x30] sm:$0xf]
        %v384 = vld [vmem:[%s278 + $0x34] sm:$0xf]
        %v385 = vld [vmem:[%s278 + $0x38] sm:$0xf]
        %v386 = vld [vmem:[%s278 + $0x3c] sm:$0xf]
        %v387 = vld [vmem:[%s287] sm:$0xff]
        %v388 = vld [vmem:[%s287 + $0x8] sm:$0xff]
        %v389 = vld [vmem:[%s287 + $0x10] sm:$0xff]
        %v390 = vld [vmem:[%s287 + $0x18] sm:$0xff]
        %v391 = vld [vmem:[%s287 + $0x20] sm:$0xff]
        %v392 = vld [vmem:[%s287 + $0x28] sm:$0xff]
        %v393 = vld [vmem:[%s287 + $0x30] sm:$0xff]
        %v394 = vld [vmem:[%s287 + $0x38] sm:$0xff]
        %v395 = vld [vmem:[%s287 + $0x40] sm:$0xff]
        %v396 = vld [vmem:[%s287 + $0x48] sm:$0xff]
        %v397 = vld [vmem:[%s287 + $0x50] sm:$0xff]
        %v398 = vld [vmem:[%s287 + $0x58] sm:$0xff]
        %v399 = vld [vmem:[%s287 + $0x60] sm:$0xff]
        %v400 = vld [vmem:[%s287 + $0x68] sm:$0xff]
        %v401 = vld [vmem:[%s287 + $0x70] sm:$0xff]
        %v402 = vld [vmem:[%s287 + $0x78] sm:$0xff]
        %v419 = vunpack.c.l.b16 %v371
        %v420 = vunpack.c.l.b16 %v372
        %v421 = vunpack.c.l.b16 %v373
        %v422 = vunpack.c.l.b16 %v374
        %v423 = vunpack.c.l.b16 %v375
        %v424 = vunpack.c.l.b16 %v376
        %v425 = vunpack.c.l.b16 %v377
        %v426 = vunpack.c.l.b16 %v378
        %v427 = vunpack.c.l.b16 %v379
        %v428 = vunpack.c.l.b16 %v380
        %v429 = vunpack.c.l.b16 %v381
        %v430 = vunpack.c.l.b16 %v382
        %v431 = vunpack.c.l.b16 %v383
        %v432 = vunpack.c.l.b16 %v384
        %v433 = vunpack.c.l.b16 %v385
        %v434 = vunpack.c.l.b16 %v386
        %v435 = vpack.c.b16 %v420, %v419
        %v436 = vpack.c.b16 %v422, %v421
        %v437 = vpack.c.b16 %v424, %v423
        %v438 = vpack.c.b16 %v426, %v425
        %v439 = vpack.c.b16 %v428, %v427
        %v440 = vpack.c.b16 %v430, %v429
        %v441 = vpack.c.b16 %v432, %v431
        %v442 = vpack.c.b16 %v434, %v433
        %v467 = vunpack.c.l.b16 %v387
        %v468 = vunpack.c.h.b16 %v387
        %v469 = vunpack.c.l.b16 %v388
        %v470 = vunpack.c.h.b16 %v388
        %v471 = vunpack.c.l.b16 %v389
        %v472 = vunpack.c.h.b16 %v389
        %v473 = vunpack.c.l.b16 %v390
        %v474 = vunpack.c.h.b16 %v390
        %v475 = vunpack.c.l.b16 %v391
        %v476 = vunpack.c.h.b16 %v391
        %v477 = vunpack.c.l.b16 %v392
        %v478 = vunpack.c.h.b16 %v392
        %v479 = vunpack.c.l.b16 %v393
        %v480 = vunpack.c.h.b16 %v393
        %v481 = vunpack.c.l.b16 %v394
        %v482 = vunpack.c.h.b16 %v394
        %v483 = vunpack.c.l.b16 %v395
        %v484 = vunpack.c.h.b16 %v395
        %v485 = vunpack.c.l.b16 %v396
        %v486 = vunpack.c.h.b16 %v396
        %v487 = vunpack.c.l.b16 %v397
        %v488 = vunpack.c.h.b16 %v397
        %v489 = vunpack.c.l.b16 %v398
        %v490 = vunpack.c.h.b16 %v398
        %v491 = vunpack.c.l.b16 %v399
        %v492 = vunpack.c.h.b16 %v399
        %v493 = vunpack.c.l.b16 %v400
        %v494 = vunpack.c.h.b16 %v400
        %v495 = vunpack.c.l.b16 %v401
        %v496 = vunpack.c.h.b16 %v401
        %v497 = vunpack.c.l.b16 %v402
        %v498 = vunpack.c.h.b16 %v402
        %v499 = vpack.c.b16 %v469, %v467
        %v500 = vpack.c.b16 %v470, %v468
        %v501 = vpack.c.b16 %v473, %v471
        %v502 = vpack.c.b16 %v474, %v472
        %v503 = vpack.c.b16 %v477, %v475
        %v504 = vpack.c.b16 %v478, %v476
        %v505 = vpack.c.b16 %v481, %v479
        %v506 = vpack.c.b16 %v482, %v480
        %v507 = vpack.c.b16 %v485, %v483
        %v508 = vpack.c.b16 %v486, %v484
        %v509 = vpack.c.b16 %v489, %v487
        %v510 = vpack.c.b16 %v490, %v488
        %v511 = vpack.c.b16 %v493, %v491
        %v512 = vpack.c.b16 %v494, %v492
        %v513 = vpack.c.b16 %v497, %v495
        %v514 = vpack.c.b16 %v498, %v496
        %531 = vmatprep.subr.bf16.mxu0 %v500
        %532 = vmatpush1.bf16.msra.mxu0 %v499
        %533 = vmatprep.subr.bf16.mxu0 %v502
        %534 = vmatpush1.bf16.msra.mxu0 %v501
        %535 = vmatprep.subr.bf16.mxu0 %v504
        %536 = vmatpush1.bf16.msra.mxu0 %v503
        %537 = vmatprep.subr.bf16.mxu0 %v506
        %538 = vmatpush1.bf16.msra.mxu0 %v505
        %539 = vmatprep.subr.bf16.mxu0 %v508
        %540 = vmatpush1.bf16.msra.mxu0 %v507
        %541 = vmatprep.subr.bf16.mxu0 %v510
        %542 = vmatpush1.bf16.msra.mxu0 %v509
        %543 = vmatprep.subr.bf16.mxu0 %v512
        %544 = vmatpush1.bf16.msra.mxu0 %v511
        %545 = vmatprep.subr.bf16.mxu0 %v514
        %546 = vmatpush1.bf16.msra.mxu0 %v513
        %547 = vmatprep.subr.bf16.mxu0 0
        %548 = vmatpush1.bf16.msra.mxu0 0
        %549 = vmatprep.subr.bf16.mxu0 0
        %550 = vmatpush1.bf16.msra.mxu0 0
        %551 = vmatprep.subr.bf16.mxu0 0
        %552 = vmatpush1.bf16.msra.mxu0 0
        %553 = vmatprep.subr.bf16.mxu0 0
        %554 = vmatpush1.bf16.msra.mxu0 0
        %555 = vmatprep.subr.bf16.mxu0 0
        %556 = vmatpush1.bf16.msra.mxu0 0
        %557 = vmatprep.subr.bf16.mxu0 0
        %558 = vmatpush1.bf16.msra.mxu0 0
        %559 = vmatprep.subr.bf16.mxu0 0
        %560 = vmatpush1.bf16.msra.mxu0 0
        %561 = vmatprep.subr.bf16.mxu0 0
        %562 = vmatpush1.bf16.msra.mxu0 0
        %563 = vmatprep.mubr.bf16.mxu0 0
        %564 = vmatmul.mubr.bf16.gmra.mrb[0].mxu0 %v435
        %v565 = vpop.f32.mrb[0].mxu0
        %v566 = vadd.f32 0.0, %v565
        %v567 = vpop.f32.mrb[0].mxu0
        %v568 = vadd.f32 0.0, %v567
        %v569 = vpop.f32.mrb[0].mxu0
        %v570 = vadd.f32 0.0, %v569
        %v571 = vpop.f32.mrb[0].mxu0
        %v572 = vadd.f32 0.0, %v571
        %573 = vmatprep.mubr.bf16.mxu0 0
        %574 = vmatmul.mubr.bf16.gmra.mrb[0].mxu0 %v436
        %v575 = vpop.f32.mrb[0].mxu0
        %v576 = vadd.f32 0.0, %v575
        %v577 = vpop.f32.mrb[0].mxu0
        %v578 = vadd.f32 0.0, %v577
        %v579 = vpop.f32.mrb[0].mxu0
        %v580 = vadd.f32 0.0, %v579
        %v581 = vpop.f32.mrb[0].mxu0
        %v582 = vadd.f32 0.0, %v581
        %583 = vmatprep.mubr.bf16.mxu0 0
        %584 = vmatmul.mubr.bf16.gmra.mrb[0].mxu0 %v437
        %v585 = vpop.f32.mrb[0].mxu0
        %v586 = vadd.f32 0.0, %v585
        %v587 = vpop.f32.mrb[0].mxu0
        %v588 = vadd.f32 0.0, %v587
        %v589 = vpop.f32.mrb[0].mxu0
        %v590 = vadd.f32 0.0, %v589
        %v591 = vpop.f32.mrb[0].mxu0
        %v592 = vadd.f32 0.0, %v591
        %593 = vmatprep.mubr.bf16.mxu0 0
        %594 = vmatmul.mubr.bf16.gmra.mrb[0].mxu0 %v438
        %v595 = vpop.f32.mrb[0].mxu0
        %v596 = vadd.f32 0.0, %v595
        %v597 = vpop.f32.mrb[0].mxu0
        %v598 = vadd.f32 0.0, %v597
        %v599 = vpop.f32.mrb[0].mxu0
        %v600 = vadd.f32 0.0, %v599
        %v601 = vpop.f32.mrb[0].mxu0
        %v602 = vadd.f32 0.0, %v601
        %603 = vmatprep.mubr.bf16.mxu0 0
        %604 = vmatmul.mubr.bf16.gmra.mrb[0].mxu0 %v439
        %v605 = vpop.f32.mrb[0].mxu0
        %v606 = vadd.f32 0.0, %v605
        %v607 = vpop.f32.mrb[0].mxu0
        %v608 = vadd.f32 0.0, %v607
        %v609 = vpop.f32.mrb[0].mxu0
        %v610 = vadd.f32 0.0, %v609
        %v611 = vpop.f32.mrb[0].mxu0
        %v612 = vadd.f32 0.0, %v611
        %613 = vmatprep.mubr.bf16.mxu0 0
        %614 = vmatmul.mubr.bf16.gmra.mrb[0].mxu0 %v440
        %v615 = vpop.f32.mrb[0].mxu0
        %v616 = vadd.f32 0.0, %v615
        %v617 = vpop.f32.mrb[0].mxu0
        %v618 = vadd.f32 0.0, %v617
        %v619 = vpop.f32.mrb[0].mxu0
        %v620 = vadd.f32 0.0, %v619
        %v621 = vpop.f32.mrb[0].mxu0
        %v622 = vadd.f32 0.0, %v621
        %623 = vmatprep.mubr.bf16.mxu0 0
        %624 = vmatmul.mubr.bf16.gmra.mrb[0].mxu0 %v441
        %v625 = vpop.f32.mrb[0].mxu0
        %v626 = vadd.f32 0.0, %v625
        %v627 = vpop.f32.mrb[0].mxu0
        %v628 = vadd.f32 0.0, %v627
        %v629 = vpop.f32.mrb[0].mxu0
        %v630 = vadd.f32 0.0, %v629
        %v631 = vpop.f32.mrb[0].mxu0
        %v632 = vadd.f32 0.0, %v631
        %633 = vmatprep.mubr.bf16.mxu0 0
        %634 = vmatmul.mubr.bf16.gmra.mrb[0].mxu0 %v442
        %v635 = vpop.f32.mrb[0].mxu0
        %v636 = vadd.f32 0.0, %v635
        %v637 = vpop.f32.mrb[0].mxu0
        %v638 = vadd.f32 0.0, %v637
        %v639 = vpop.f32.mrb[0].mxu0
        %v640 = vadd.f32 0.0, %v639
        %v641 = vpop.f32.mrb[0].mxu0
        %v642 = vadd.f32 0.0, %v641
        %643 = vdwg.mxu0
        %v644 = vld [vmem:[%s296] sm:$0xff]
        %v645 = vld [vmem:[%s296 + $0x8] sm:$0xff]
        %v646 = vld [vmem:[%s296 + $0x10] sm:$0xff]
        %v647 = vld [vmem:[%s296 + $0x18] sm:$0xff]
        %v648 = vld [vmem:[%s296 + $0x20] sm:$0xff]
        %v649 = vld [vmem:[%s296 + $0x28] sm:$0xff]
        %v650 = vld [vmem:[%s296 + $0x30] sm:$0xff]
        %v651 = vld [vmem:[%s296 + $0x38] sm:$0xff]
        %v652 = vld [vmem:[%s296 + $0x40] sm:$0xff]
        %v653 = vld [vmem:[%s296 + $0x48] sm:$0xff]
        %v654 = vld [vmem:[%s296 + $0x50] sm:$0xff]
        %v655 = vld [vmem:[%s296 + $0x58] sm:$0xff]
        %v656 = vld [vmem:[%s296 + $0x60] sm:$0xff]
        %v657 = vld [vmem:[%s296 + $0x68] sm:$0xff]
        %v658 = vld [vmem:[%s296 + $0x70] sm:$0xff]
        %v659 = vld [vmem:[%s296 + $0x78] sm:$0xff]
        %v676 = vunpack.c.l.b16 %v644
        %v677 = vunpack.c.h.b16 %v644
        %v678 = vunpack.c.l.b16 %v645
        %v679 = vunpack.c.h.b16 %v645
        %v680 = vunpack.c.l.b16 %v646
        %v681 = vunpack.c.h.b16 %v646
        %v682 = vunpack.c.l.b16 %v647
        %v683 = vunpack.c.h.b16 %v647
        %v684 = vunpack.c.l.b16 %v648
        %v685 = vunpack.c.h.b16 %v648
        %v686 = vunpack.c.l.b16 %v649
        %v687 = vunpack.c.h.b16 %v649
        %v688 = vunpack.c.l.b16 %v650
        %v689 = vunpack.c.h.b16 %v650
        %v690 = vunpack.c.l.b16 %v651
        %v691 = vunpack.c.h.b16 %v651
        %v692 = vunpack.c.l.b16 %v652
        %v693 = vunpack.c.h.b16 %v652
        %v694 = vunpack.c.l.b16 %v653
        %v695 = vunpack.c.h.b16 %v653
        %v696 = vunpack.c.l.b16 %v654
        %v697 = vunpack.c.h.b16 %v654
        %v698 = vunpack.c.l.b16 %v655
        %v699 = vunpack.c.h.b16 %v655
        %v700 = vunpack.c.l.b16 %v656
        %v701 = vunpack.c.h.b16 %v656
        %v702 = vunpack.c.l.b16 %v657
        %v703 = vunpack.c.h.b16 %v657
        %v704 = vunpack.c.l.b16 %v658
        %v705 = vunpack.c.h.b16 %v658
        %v706 = vunpack.c.l.b16 %v659
        %v707 = vunpack.c.h.b16 %v659
        %v708 = vpack.c.b16 %v678, %v676
        %v709 = vpack.c.b16 %v679, %v677
        %v710 = vpack.c.b16 %v682, %v680
        %v711 = vpack.c.b16 %v683, %v681
        %v712 = vpack.c.b16 %v686, %v684
        %v713 = vpack.c.b16 %v687, %v685
        %v714 = vpack.c.b16 %v690, %v688
        %v715 = vpack.c.b16 %v691, %v689
        %v716 = vpack.c.b16 %v694, %v692
        %v717 = vpack.c.b16 %v695, %v693
        %v718 = vpack.c.b16 %v698, %v696
        %v719 = vpack.c.b16 %v699, %v697
        %v720 = vpack.c.b16 %v702, %v700
        %v721 = vpack.c.b16 %v703, %v701
        %v722 = vpack.c.b16 %v706, %v704
        %v723 = vpack.c.b16 %v707, %v705
        %740 = vmatprep.subr.bf16.mxu0 %v709
        %741 = vmatpush1.bf16.msra.mxu0 %v708
        %742 = vmatprep.subr.bf16.mxu0 %v711
        %743 = vmatpush1.bf16.msra.mxu0 %v710
        %744 = vmatprep.subr.bf16.mxu0 %v713
        %745 = vmatpush1.bf16.msra.mxu0 %v712
        %746 = vmatprep.subr.bf16.mxu0 %v715
        %747 = vmatpush1.bf16.msra.mxu0 %v714
        %748 = vmatprep.subr.bf16.mxu0 %v717
        %749 = vmatpush1.bf16.msra.mxu0 %v716
        %750 = vmatprep.subr.bf16.mxu0 %v719
        %751 = vmatpush1.bf16.msra.mxu0 %v718
        %752 = vmatprep.subr.bf16.mxu0 %v721
        %753 = vmatpush1.bf16.msra.mxu0 %v720
        %754 = vmatprep.subr.bf16.mxu0 %v723
        %755 = vmatpush1.bf16.msra.mxu0 %v722
        %756 = vmatprep.subr.bf16.mxu0 0
        %757 = vmatpush1.bf16.msra.mxu0 0
        %758 = vmatprep.subr.bf16.mxu0 0
        %759 = vmatpush1.bf16.msra.mxu0 0
        %760 = vmatprep.subr.bf16.mxu0 0
        %761 = vmatpush1.bf16.msra.mxu0 0
        %762 = vmatprep.subr.bf16.mxu0 0
        %763 = vmatpush1.bf16.msra.mxu0 0
        %764 = vmatprep.subr.bf16.mxu0 0
        %765 = vmatpush1.bf16.msra.mxu0 0
        %766 = vmatprep.subr.bf16.mxu0 0
        %767 = vmatpush1.bf16.msra.mxu0 0
        %768 = vmatprep.subr.bf16.mxu0 0
        %769 = vmatpush1.bf16.msra.mxu0 0
        %770 = vmatprep.subr.bf16.mxu0 0
        %771 = vmatpush1.bf16.msra.mxu0 0
        %772 = vmatprep.mubr.bf16.mxu0 0
        %773 = vmatmul.mubr.bf16.gmra.mrb[0].mxu0 %v435
        %v774 = vpop.f32.mrb[0].mxu0
        %v775 = vadd.f32 0.0, %v774
        %v776 = vpop.f32.mrb[0].mxu0
        %v777 = vadd.f32 0.0, %v776
        %v778 = vpop.f32.mrb[0].mxu0
        %v779 = vadd.f32 0.0, %v778
        %v780 = vpop.f32.mrb[0].mxu0
        %v781 = vadd.f32 0.0, %v780
        %782 = vmatprep.mubr.bf16.mxu0 0
        %783 = vmatmul.mubr.bf16.gmra.mrb[0].mxu0 %v436
        %v784 = vpop.f32.mrb[0].mxu0
        %v785 = vadd.f32 0.0, %v784
        %v786 = vpop.f32.mrb[0].mxu0
        %v787 = vadd.f32 0.0, %v786
        %v788 = vpop.f32.mrb[0].mxu0
        %v789 = vadd.f32 0.0, %v788
        %v790 = vpop.f32.mrb[0].mxu0
        %v791 = vadd.f32 0.0, %v790
        %792 = vmatprep.mubr.bf16.mxu0 0
        %793 = vmatmul.mubr.bf16.gmra.mrb[0].mxu0 %v437
        %v794 = vpop.f32.mrb[0].mxu0
        %v795 = vadd.f32 0.0, %v794
        %v796 = vpop.f32.mrb[0].mxu0
        %v797 = vadd.f32 0.0, %v796
        %v798 = vpop.f32.mrb[0].mxu0
        %v799 = vadd.f32 0.0, %v798
        %v800 = vpop.f32.mrb[0].mxu0
        %v801 = vadd.f32 0.0, %v800
        %802 = vmatprep.mubr.bf16.mxu0 0
        %803 = vmatmul.mubr.bf16.gmra.mrb[0].mxu0 %v438
        %v804 = vpop.f32.mrb[0].mxu0
        %v805 = vadd.f32 0.0, %v804
        %v806 = vpop.f32.mrb[0].mxu0
        %v807 = vadd.f32 0.0, %v806
        %v808 = vpop.f32.mrb[0].mxu0
        %v809 = vadd.f32 0.0, %v808
        %v810 = vpop.f32.mrb[0].mxu0
        %v811 = vadd.f32 0.0, %v810
        %812 = vmatprep.mubr.bf16.mxu0 0
        %813 = vmatmul.mubr.bf16.gmra.mrb[0].mxu0 %v439
        %v814 = vpop.f32.mrb[0].mxu0
        %v815 = vadd.f32 0.0, %v814
        %v816 = vpop.f32.mrb[0].mxu0
        %v817 = vadd.f32 0.0, %v816
        %v818 = vpop.f32.mrb[0].mxu0
        %v819 = vadd.f32 0.0, %v818
        %v820 = vpop.f32.mrb[0].mxu0
        %v821 = vadd.f32 0.0, %v820
        %822 = vmatprep.mubr.bf16.mxu0 0
        %823 = vmatmul.mubr.bf16.gmra.mrb[0].mxu0 %v440
        %v824 = vpop.f32.mrb[0].mxu0
        %v825 = vadd.f32 0.0, %v824
        %v826 = vpop.f32.mrb[0].mxu0
        %v827 = vadd.f32 0.0, %v826
        %v828 = vpop.f32.mrb[0].mxu0
        %v829 = vadd.f32 0.0, %v828
        %v830 = vpop.f32.mrb[0].mxu0
        %v831 = vadd.f32 0.0, %v830
        %832 = vmatprep.mubr.bf16.mxu0 0
        %833 = vmatmul.mubr.bf16.gmra.mrb[0].mxu0 %v441
        %v834 = vpop.f32.mrb[0].mxu0
        %v835 = vadd.f32 0.0, %v834
        %v836 = vpop.f32.mrb[0].mxu0
        %v837 = vadd.f32 0.0, %v836
        %v838 = vpop.f32.mrb[0].mxu0
        %v839 = vadd.f32 0.0, %v838
        %v840 = vpop.f32.mrb[0].mxu0
        %v841 = vadd.f32 0.0, %v840
        %842 = vmatprep.mubr.bf16.mxu0 0
        %843 = vmatmul.mubr.bf16.gmra.mrb[0].mxu0 %v442
        %v844 = vpop.f32.mrb[0].mxu0
        %v845 = vadd.f32 0.0, %v844
        %v846 = vpop.f32.mrb[0].mxu0
        %v847 = vadd.f32 0.0, %v846
        %v848 = vpop.f32.mrb[0].mxu0
        %v849 = vadd.f32 0.0, %v848
        %v850 = vpop.f32.mrb[0].mxu0
        %v851 = vadd.f32 0.0, %v850
        %852 = vdwg.mxu0
        %v853 = vxor.u32 %v566, 2147483648
        %v854 = vxor.u32 %v568, 2147483648
        %v855 = vxor.u32 %v570, 2147483648
        %v856 = vxor.u32 %v572, 2147483648
        %v857 = vxor.u32 %v576, 2147483648
        %v858 = vxor.u32 %v578, 2147483648
        %v859 = vxor.u32 %v580, 2147483648
        %v860 = vxor.u32 %v582, 2147483648
        %v861 = vxor.u32 %v586, 2147483648
        %v862 = vxor.u32 %v588, 2147483648
        %v863 = vxor.u32 %v590, 2147483648
        %v864 = vxor.u32 %v592, 2147483648
        %v865 = vxor.u32 %v596, 2147483648
        %v866 = vxor.u32 %v598, 2147483648
        %v867 = vxor.u32 %v600, 2147483648
        %v868 = vxor.u32 %v602, 2147483648
        %v869 = vxor.u32 %v606, 2147483648
        %v870 = vxor.u32 %v608, 2147483648
        %v871 = vxor.u32 %v610, 2147483648
        %v872 = vxor.u32 %v612, 2147483648
        %v873 = vxor.u32 %v616, 2147483648
        %v874 = vxor.u32 %v618, 2147483648
        %v875 = vxor.u32 %v620, 2147483648
        %v876 = vxor.u32 %v622, 2147483648
        %v877 = vxor.u32 %v626, 2147483648
        %v878 = vxor.u32 %v628, 2147483648
        %v879 = vxor.u32 %v630, 2147483648
        %v880 = vxor.u32 %v632, 2147483648
        %v881 = vxor.u32 %v636, 2147483648
        %v882 = vxor.u32 %v638, 2147483648
        %v883 = vxor.u32 %v640, 2147483648
        %v884 = vxor.u32 %v642, 2147483648
        %v885 = vmul.f32 %v853, 1.442695
        %v886 = vpow.pop %v885
        %v887 = vmul.f32 %v854, 1.442695
        %v888 = vpow.pop %v887
        %v889 = vmul.f32 %v855, 1.442695
        %v890 = vpow.pop %v889
        %v891 = vmul.f32 %v856, 1.442695
        %v892 = vpow.pop %v891
        %v893 = vmul.f32 %v857, 1.442695
        %v894 = vpow.pop %v893
        %v895 = vmul.f32 %v858, 1.442695
        %v896 = vpow.pop %v895
        %v897 = vmul.f32 %v859, 1.442695
        %v898 = vpow.pop %v897
        %v899 = vmul.f32 %v860, 1.442695
        %v900 = vpow.pop %v899
        %v901 = vmul.f32 %v861, 1.442695
        %v902 = vpow.pop %v901
        %v903 = vmul.f32 %v862, 1.442695
        %v904 = vpow.pop %v903
        %v905 = vmul.f32 %v863, 1.442695
        %v906 = vpow.pop %v905
        %v907 = vmul.f32 %v864, 1.442695
        %v908 = vpow.pop %v907
        %v909 = vmul.f32 %v865, 1.442695
        %v910 = vpow.pop %v909
        %v911 = vmul.f32 %v866, 1.442695
        %v912 = vpow.pop %v911
        %v913 = vmul.f32 %v867, 1.442695
        %v914 = vpow.pop %v913
        %v915 = vmul.f32 %v868, 1.442695
        %v916 = vpow.pop %v915
        %v917 = vmul.f32 %v869, 1.442695
        %v918 = vpow.pop %v917
        %v919 = vmul.f32 %v870, 1.442695
        %v920 = vpow.pop %v919
        %v921 = vmul.f32 %v871, 1.442695
        %v922 = vpow.pop %v921
        %v923 = vmul.f32 %v872, 1.442695
        %v924 = vpow.pop %v923
        %v925 = vmul.f32 %v873, 1.442695
        %v926 = vpow.pop %v925
        %v927 = vmul.f32 %v874, 1.442695
        %v928 = vpow.pop %v927
        %v929 = vmul.f32 %v875, 1.442695
        %v930 = vpow.pop %v929
        %v931 = vmul.f32 %v876, 1.442695
        %v932 = vpow.pop %v931
        %v933 = vmul.f32 %v877, 1.442695
        %v934 = vpow.pop %v933
        %v935 = vmul.f32 %v878, 1.442695
        %v936 = vpow.pop %v935
        %v937 = vmul.f32 %v879, 1.442695
        %v938 = vpow.pop %v937
        %v939 = vmul.f32 %v880, 1.442695
        %v940 = vpow.pop %v939
        %v941 = vmul.f32 %v881, 1.442695
        %v942 = vpow.pop %v941
        %v943 = vmul.f32 %v882, 1.442695
        %v944 = vpow.pop %v943
        %v945 = vmul.f32 %v883, 1.442695
        %v946 = vpow.pop %v945
        %v947 = vmul.f32 %v884, 1.442695
        %v948 = vpow.pop %v947
        %v949 = vadd.f32 %v886, 1.0
        %v950 = vadd.f32 %v888, 1.0
        %v951 = vadd.f32 %v890, 1.0
        %v952 = vadd.f32 %v892, 1.0
        %v953 = vadd.f32 %v894, 1.0
        %v954 = vadd.f32 %v896, 1.0
        %v955 = vadd.f32 %v898, 1.0
        %v956 = vadd.f32 %v900, 1.0
        %v957 = vadd.f32 %v902, 1.0
        %v958 = vadd.f32 %v904, 1.0
        %v959 = vadd.f32 %v906, 1.0
        %v960 = vadd.f32 %v908, 1.0
        %v961 = vadd.f32 %v910, 1.0
        %v962 = vadd.f32 %v912, 1.0
        %v963 = vadd.f32 %v914, 1.0
        %v964 = vadd.f32 %v916, 1.0
        %v965 = vadd.f32 %v918, 1.0
        %v966 = vadd.f32 %v920, 1.0
        %v967 = vadd.f32 %v922, 1.0
        %v968 = vadd.f32 %v924, 1.0
        %v969 = vadd.f32 %v926, 1.0
        %v970 = vadd.f32 %v928, 1.0
        %v971 = vadd.f32 %v930, 1.0
        %v972 = vadd.f32 %v932, 1.0
        %v973 = vadd.f32 %v934, 1.0
        %v974 = vadd.f32 %v936, 1.0
        %v975 = vadd.f32 %v938, 1.0
        %v976 = vadd.f32 %v940, 1.0
        %v977 = vadd.f32 %v942, 1.0
        %v978 = vadd.f32 %v944, 1.0
        %v979 = vadd.f32 %v946, 1.0
        %v980 = vadd.f32 %v948, 1.0
        %v981 = vrcp.pop %v949
        %v982 = vmul.f32 1.0, %v981
        %v983 = vrcp.pop %v950
        %v984 = vmul.f32 1.0, %v983
        %v985 = vrcp.pop %v951
        %v986 = vmul.f32 1.0, %v985
        %v987 = vrcp.pop %v952
        %v988 = vmul.f32 1.0, %v987
        %v989 = vrcp.pop %v953
        %v990 = vmul.f32 1.0, %v989
        %v991 = vrcp.pop %v954
        %v992 = vmul.f32 1.0, %v991
        %v993 = vrcp.pop %v955
        %v994 = vmul.f32 1.0, %v993
        %v995 = vrcp.pop %v956
        %v996 = vmul.f32 1.0, %v995
        %v997 = vrcp.pop %v957
        %v998 = vmul.f32 1.0, %v997
        %v999 = vrcp.pop %v958
        %v1000 = vmul.f32 1.0, %v999
        %v1001 = vrcp.pop %v959
        %v1002 = vmul.f32 1.0, %v1001
        %v1003 = vrcp.pop %v960
        %v1004 = vmul.f32 1.0, %v1003
        %v1005 = vrcp.pop %v961
        %v1006 = vmul.f32 1.0, %v1005
        %v1007 = vrcp.pop %v962
        %v1008 = vmul.f32 1.0, %v1007
        %v1009 = vrcp.pop %v963
        %v1010 = vmul.f32 1.0, %v1009
        %v1011 = vrcp.pop %v964
        %v1012 = vmul.f32 1.0, %v1011
        %v1013 = vrcp.pop %v965
        %v1014 = vmul.f32 1.0, %v1013
        %v1015 = vrcp.pop %v966
        %v1016 = vmul.f32 1.0, %v1015
        %v1017 = vrcp.pop %v967
        %v1018 = vmul.f32 1.0, %v1017
        %v1019 = vrcp.pop %v968
        %v1020 = vmul.f32 1.0, %v1019
        %v1021 = vrcp.pop %v969
        %v1022 = vmul.f32 1.0, %v1021
        %v1023 = vrcp.pop %v970
        %v1024 = vmul.f32 1.0, %v1023
        %v1025 = vrcp.pop %v971
        %v1026 = vmul.f32 1.0, %v1025
        %v1027 = vrcp.pop %v972
        %v1028 = vmul.f32 1.0, %v1027
        %v1029 = vrcp.pop %v973
        %v1030 = vmul.f32 1.0, %v1029
        %v1031 = vrcp.pop %v974
        %v1032 = vmul.f32 1.0, %v1031
        %v1033 = vrcp.pop %v975
        %v1034 = vmul.f32 1.0, %v1033
        %v1035 = vrcp.pop %v976
        %v1036 = vmul.f32 1.0, %v1035
        %v1037 = vrcp.pop %v977
        %v1038 = vmul.f32 1.0, %v1037
        %v1039 = vrcp.pop %v978
        %v1040 = vmul.f32 1.0, %v1039
        %v1041 = vrcp.pop %v979
        %v1042 = vmul.f32 1.0, %v1041
        %v1043 = vrcp.pop %v980
        %v1044 = vmul.f32 1.0, %v1043
        %v1045 = vmul.f32 %v566, %v982
        %v1046 = vmul.f32 %v568, %v984
        %v1047 = vmul.f32 %v570, %v986
        %v1048 = vmul.f32 %v572, %v988
        %v1049 = vmul.f32 %v576, %v990
        %v1050 = vmul.f32 %v578, %v992
        %v1051 = vmul.f32 %v580, %v994
        %v1052 = vmul.f32 %v582, %v996
        %v1053 = vmul.f32 %v586, %v998
        %v1054 = vmul.f32 %v588, %v1000
        %v1055 = vmul.f32 %v590, %v1002
        %v1056 = vmul.f32 %v592, %v1004
        %v1057 = vmul.f32 %v596, %v1006
        %v1058 = vmul.f32 %v598, %v1008
        %v1059 = vmul.f32 %v600, %v1010
        %v1060 = vmul.f32 %v602, %v1012
        %v1061 = vmul.f32 %v606, %v1014
        %v1062 = vmul.f32 %v608, %v1016
        %v1063 = vmul.f32 %v610, %v1018
        %v1064 = vmul.f32 %v612, %v1020
        %v1065 = vmul.f32 %v616, %v1022
        %v1066 = vmul.f32 %v618, %v1024
        %v1067 = vmul.f32 %v620, %v1026
        %v1068 = vmul.f32 %v622, %v1028
        %v1069 = vmul.f32 %v626, %v1030
        %v1070 = vmul.f32 %v628, %v1032
        %v1071 = vmul.f32 %v630, %v1034
        %v1072 = vmul.f32 %v632, %v1036
        %v1073 = vmul.f32 %v636, %v1038
        %v1074 = vmul.f32 %v638, %v1040
        %v1075 = vmul.f32 %v640, %v1042
        %v1076 = vmul.f32 %v642, %v1044
        %v1077 = vmul.f32 %v1045, %v775
        %v1078 = vmul.f32 %v1046, %v777
        %v1079 = vmul.f32 %v1047, %v779
        %v1080 = vmul.f32 %v1048, %v781
        %v1081 = vmul.f32 %v1049, %v785
        %v1082 = vmul.f32 %v1050, %v787
        %v1083 = vmul.f32 %v1051, %v789
        %v1084 = vmul.f32 %v1052, %v791
        %v1085 = vmul.f32 %v1053, %v795
        %v1086 = vmul.f32 %v1054, %v797
        %v1087 = vmul.f32 %v1055, %v799
        %v1088 = vmul.f32 %v1056, %v801
        %v1089 = vmul.f32 %v1057, %v805
        %v1090 = vmul.f32 %v1058, %v807
        %v1091 = vmul.f32 %v1059, %v809
        %v1092 = vmul.f32 %v1060, %v811
        %v1093 = vmul.f32 %v1061, %v815
        %v1094 = vmul.f32 %v1062, %v817
        %v1095 = vmul.f32 %v1063, %v819
        %v1096 = vmul.f32 %v1064, %v821
        %v1097 = vmul.f32 %v1065, %v825
        %v1098 = vmul.f32 %v1066, %v827
        %v1099 = vmul.f32 %v1067, %v829
        %v1100 = vmul.f32 %v1068, %v831
        %v1101 = vmul.f32 %v1069, %v835
        %v1102 = vmul.f32 %v1070, %v837
        %v1103 = vmul.f32 %v1071, %v839
        %v1104 = vmul.f32 %v1072, %v841
        %v1105 = vmul.f32 %v1073, %v845
        %v1106 = vmul.f32 %v1074, %v847
        %v1107 = vmul.f32 %v1075, %v849
        %v1108 = vmul.f32 %v1076, %v851
        %v1109 = vld [vmem:[#allocation2] sm:$0xff]
        %v1110 = vld [vmem:[#allocation2 + $0x8] sm:$0xff]
        %v1111 = vld [vmem:[#allocation2 + $0x10] sm:$0xff]
        %v1112 = vld [vmem:[#allocation2 + $0x18] sm:$0xff]
        %v1113 = vld [vmem:[#allocation2 + $0x20] sm:$0xff]
        %v1114 = vld [vmem:[#allocation2 + $0x28] sm:$0xff]
        %v1115 = vld [vmem:[#allocation2 + $0x30] sm:$0xff]
        %v1116 = vld [vmem:[#allocation2 + $0x38] sm:$0xff]
        %v1117 = vld [vmem:[#allocation2 + $0x40] sm:$0xff]
        %v1118 = vld [vmem:[#allocation2 + $0x48] sm:$0xff]
        %v1119 = vld [vmem:[#allocation2 + $0x50] sm:$0xff]
        %v1120 = vld [vmem:[#allocation2 + $0x58] sm:$0xff]
        %v1121 = vld [vmem:[#allocation2 + $0x60] sm:$0xff]
        %v1122 = vld [vmem:[#allocation2 + $0x68] sm:$0xff]
        %v1123 = vld [vmem:[#allocation2 + $0x70] sm:$0xff]
        %v1124 = vld [vmem:[#allocation2 + $0x78] sm:$0xff]
        %v1125 = vpack.c.bf16 %v1079, %v1077
        %v1126 = vpack.c.bf16 %v1080, %v1078
        %v1127 = vpack.c.bf16 %v1083, %v1081
        %v1128 = vpack.c.bf16 %v1084, %v1082
        %v1129 = vpack.c.bf16 %v1087, %v1085
        %v1130 = vpack.c.bf16 %v1088, %v1086
        %v1131 = vpack.c.bf16 %v1091, %v1089
        %v1132 = vpack.c.bf16 %v1092, %v1090
        %v1133 = vpack.c.bf16 %v1095, %v1093
        %v1134 = vpack.c.bf16 %v1096, %v1094
        %v1135 = vpack.c.bf16 %v1099, %v1097
        %v1136 = vpack.c.bf16 %v1100, %v1098
        %v1137 = vpack.c.bf16 %v1103, %v1101
        %v1138 = vpack.c.bf16 %v1104, %v1102
        %v1139 = vpack.c.bf16 %v1107, %v1105
        %v1140 = vpack.c.bf16 %v1108, %v1106
        %v1141 = vld [vmem:[%s305] sm:$0xf]
        %v1142 = vld [vmem:[%s305 + $0x4] sm:$0xf]
        %v1143 = vld [vmem:[%s305 + $0x8] sm:$0xf]
        %v1144 = vld [vmem:[%s305 + $0xc] sm:$0xf]
        %v1145 = vld [vmem:[%s305 + $0x10] sm:$0xf]
        %v1146 = vld [vmem:[%s305 + $0x14] sm:$0xf]
        %v1147 = vld [vmem:[%s305 + $0x18] sm:$0xf]
        %v1148 = vld [vmem:[%s305 + $0x1c] sm:$0xf]
        %v1149 = vld [vmem:[%s305 + $0x20] sm:$0xf]
        %v1150 = vld [vmem:[%s305 + $0x24] sm:$0xf]
        %v1151 = vld [vmem:[%s305 + $0x28] sm:$0xf]
        %v1152 = vld [vmem:[%s305 + $0x2c] sm:$0xf]
        %v1153 = vld [vmem:[%s305 + $0x30] sm:$0xf]
        %v1154 = vld [vmem:[%s305 + $0x34] sm:$0xf]
        %v1155 = vld [vmem:[%s305 + $0x38] sm:$0xf]
        %v1156 = vld [vmem:[%s305 + $0x3c] sm:$0xf]
        %v1157 = vld [vmem:[%s305 + $0x40] sm:$0xf]
        %v1158 = vld [vmem:[%s305 + $0x44] sm:$0xf]
        %v1159 = vld [vmem:[%s305 + $0x48] sm:$0xf]
        %v1160 = vld [vmem:[%s305 + $0x4c] sm:$0xf]
        %v1161 = vld [vmem:[%s305 + $0x50] sm:$0xf]
        %v1162 = vld [vmem:[%s305 + $0x54] sm:$0xf]
        %v1163 = vld [vmem:[%s305 + $0x58] sm:$0xf]
        %v1164 = vld [vmem:[%s305 + $0x5c] sm:$0xf]
        %v1165 = vld [vmem:[%s305 + $0x60] sm:$0xf]
        %v1166 = vld [vmem:[%s305 + $0x64] sm:$0xf]
        %v1167 = vld [vmem:[%s305 + $0x68] sm:$0xf]
        %v1168 = vld [vmem:[%s305 + $0x6c] sm:$0xf]
        %v1169 = vld [vmem:[%s305 + $0x70] sm:$0xf]
        %v1170 = vld [vmem:[%s305 + $0x74] sm:$0xf]
        %v1171 = vld [vmem:[%s305 + $0x78] sm:$0xf]
        %v1172 = vld [vmem:[%s305 + $0x7c] sm:$0xf]
        %v1205 = vunpack.c.l.b16 %v1141
        %v1206 = vunpack.c.l.b16 %v1142
        %v1207 = vunpack.c.l.b16 %v1143
        %v1208 = vunpack.c.l.b16 %v1144
        %v1209 = vunpack.c.l.b16 %v1145
        %v1210 = vunpack.c.l.b16 %v1146
        %v1211 = vunpack.c.l.b16 %v1147
        %v1212 = vunpack.c.l.b16 %v1148
        %v1213 = vunpack.c.l.b16 %v1149
        %v1214 = vunpack.c.l.b16 %v1150
        %v1215 = vunpack.c.l.b16 %v1151
        %v1216 = vunpack.c.l.b16 %v1152
        %v1217 = vunpack.c.l.b16 %v1153
        %v1218 = vunpack.c.l.b16 %v1154
        %v1219 = vunpack.c.l.b16 %v1155
        %v1220 = vunpack.c.l.b16 %v1156
        %v1221 = vunpack.c.l.b16 %v1157
        %v1222 = vunpack.c.l.b16 %v1158
        %v1223 = vunpack.c.l.b16 %v1159
        %v1224 = vunpack.c.l.b16 %v1160
        %v1225 = vunpack.c.l.b16 %v1161
        %v1226 = vunpack.c.l.b16 %v1162
        %v1227 = vunpack.c.l.b16 %v1163
        %v1228 = vunpack.c.l.b16 %v1164
        %v1229 = vunpack.c.l.b16 %v1165
        %v1230 = vunpack.c.l.b16 %v1166
        %v1231 = vunpack.c.l.b16 %v1167
        %v1232 = vunpack.c.l.b16 %v1168
        %v1233 = vunpack.c.l.b16 %v1169
        %v1234 = vunpack.c.l.b16 %v1170
        %v1235 = vunpack.c.l.b16 %v1171
        %v1236 = vunpack.c.l.b16 %v1172
        %v1237 = vpack.c.b16 %v1206, %v1205
        %v1238 = vpack.c.b16 %v1208, %v1207
        %v1239 = vpack.c.b16 %v1210, %v1209
        %v1240 = vpack.c.b16 %v1212, %v1211
        %v1241 = vpack.c.b16 %v1214, %v1213
        %v1242 = vpack.c.b16 %v1216, %v1215
        %v1243 = vpack.c.b16 %v1218, %v1217
        %v1244 = vpack.c.b16 %v1220, %v1219
        %v1245 = vpack.c.b16 %v1222, %v1221
        %v1246 = vpack.c.b16 %v1224, %v1223
        %v1247 = vpack.c.b16 %v1226, %v1225
        %v1248 = vpack.c.b16 %v1228, %v1227
        %v1249 = vpack.c.b16 %v1230, %v1229
        %v1250 = vpack.c.b16 %v1232, %v1231
        %v1251 = vpack.c.b16 %v1234, %v1233
        %v1252 = vpack.c.b16 %v1236, %v1235
        %1269 = vmatprep.subr.bf16.mxu0 0
        %1270 = vmatpush1.bf16.msra.mxu0 %v1237
        %1271 = vmatprep.subr.bf16.mxu0 0
        %1272 = vmatpush1.bf16.msra.mxu0 %v1238
        %1273 = vmatprep.subr.bf16.mxu0 0
        %1274 = vmatpush1.bf16.msra.mxu0 %v1239
        %1275 = vmatprep.subr.bf16.mxu0 0
        %1276 = vmatpush1.bf16.msra.mxu0 %v1240
        %1277 = vmatprep.subr.bf16.mxu0 0
        %1278 = vmatpush1.bf16.msra.mxu0 %v1241
        %1279 = vmatprep.subr.bf16.mxu0 0
        %1280 = vmatpush1.bf16.msra.mxu0 %v1242
        %1281 = vmatprep.subr.bf16.mxu0 0
        %1282 = vmatpush1.bf16.msra.mxu0 %v1243
        %1283 = vmatprep.subr.bf16.mxu0 0
        %1284 = vmatpush1.bf16.msra.mxu0 %v1244
        %1285 = vmatprep.subr.bf16.mxu0 0
        %1286 = vmatpush1.bf16.msra.mxu0 %v1245
        %1287 = vmatprep.subr.bf16.mxu0 0
        %1288 = vmatpush1.bf16.msra.mxu0 %v1246
        %1289 = vmatprep.subr.bf16.mxu0 0
        %1290 = vmatpush1.bf16.msra.mxu0 %v1247
        %1291 = vmatprep.subr.bf16.mxu0 0
        %1292 = vmatpush1.bf16.msra.mxu0 %v1248
        %1293 = vmatprep.subr.bf16.mxu0 0
        %1294 = vmatpush1.bf16.msra.mxu0 %v1249
        %1295 = vmatprep.subr.bf16.mxu0 0
        %1296 = vmatpush1.bf16.msra.mxu0 %v1250
        %1297 = vmatprep.subr.bf16.mxu0 0
        %1298 = vmatpush1.bf16.msra.mxu0 %v1251
        %1299 = vmatprep.subr.bf16.mxu0 0
        %1300 = vmatpush1.bf16.msra.mxu0 %v1252
        %1301 = vmatprep.mubr.bf16.mxu0 %v1126
        %1302 = vmatmul.mubr.bf16.gmra.mrb[0].mxu0 %v1125
        %v1303 = vpop.f32.mrb[0].mxu0
        %v1304 = vadd.f32 0.0, %v1303
        %v1305 = vpop.f32.mrb[0].mxu0
        %v1306 = vpop.f32.mrb[0].mxu0
        %v1307 = vadd.f32 0.0, %v1306
        %v1308 = vpop.f32.mrb[0].mxu0
        %1309 = vmatprep.mubr.bf16.mxu0 %v1128
        %1310 = vmatmul.mubr.bf16.gmra.mrb[0].mxu0 %v1127
        %v1311 = vpop.f32.mrb[0].mxu0
        %v1312 = vadd.f32 0.0, %v1311
        %v1313 = vpop.f32.mrb[0].mxu0
        %v1314 = vpop.f32.mrb[0].mxu0
        %v1315 = vadd.f32 0.0, %v1314
        %v1316 = vpop.f32.mrb[0].mxu0
        %1317 = vmatprep.mubr.bf16.mxu0 %v1130
        %1318 = vmatmul.mubr.bf16.gmra.mrb[0].mxu0 %v1129
        %v1319 = vpop.f32.mrb[0].mxu0
        %v1320 = vadd.f32 0.0, %v1319
        %v1321 = vpop.f32.mrb[0].mxu0
        %v1322 = vpop.f32.mrb[0].mxu0
        %v1323 = vadd.f32 0.0, %v1322
        %v1324 = vpop.f32.mrb[0].mxu0
        %1325 = vmatprep.mubr.bf16.mxu0 %v1132
        %1326 = vmatmul.mubr.bf16.gmra.mrb[0].mxu0 %v1131
        %v1327 = vpop.f32.mrb[0].mxu0
        %v1328 = vadd.f32 0.0, %v1327
        %v1329 = vpop.f32.mrb[0].mxu0
        %v1330 = vpop.f32.mrb[0].mxu0
        %v1331 = vadd.f32 0.0, %v1330
        %v1332 = vpop.f32.mrb[0].mxu0
        %1333 = vmatprep.mubr.bf16.mxu0 %v1134
        %1334 = vmatmul.mubr.bf16.gmra.mrb[0].mxu0 %v1133
        %v1335 = vpop.f32.mrb[0].mxu0
        %v1336 = vadd.f32 0.0, %v1335
        %v1337 = vpop.f32.mrb[0].mxu0
        %v1338 = vpop.f32.mrb[0].mxu0
        %v1339 = vadd.f32 0.0, %v1338
        %v1340 = vpop.f32.mrb[0].mxu0
        %1341 = vmatprep.mubr.bf16.mxu0 %v1136
        %1342 = vmatmul.mubr.bf16.gmra.mrb[0].mxu0 %v1135
        %v1343 = vpop.f32.mrb[0].mxu0
        %v1344 = vadd.f32 0.0, %v1343
        %v1345 = vpop.f32.mrb[0].mxu0
        %v1346 = vpop.f32.mrb[0].mxu0
        %v1347 = vadd.f32 0.0, %v1346
        %v1348 = vpop.f32.mrb[0].mxu0
        %1349 = vmatprep.mubr.bf16.mxu0 %v1138
        %1350 = vmatmul.mubr.bf16.gmra.mrb[0].mxu0 %v1137
        %v1351 = vpop.f32.mrb[0].mxu0
        %v1352 = vadd.f32 0.0, %v1351
        %v1353 = vpop.f32.mrb[0].mxu0
        %v1354 = vpop.f32.mrb[0].mxu0
        %v1355 = vadd.f32 0.0, %v1354
        %v1356 = vpop.f32.mrb[0].mxu0
        %1357 = vmatprep.mubr.bf16.mxu0 %v1140
        %1358 = vmatmul.mubr.bf16.gmra.mrb[0].mxu0 %v1139
        %v1359 = vpop.f32.mrb[0].mxu0
        %v1360 = vadd.f32 0.0, %v1359
        %v1361 = vpop.f32.mrb[0].mxu0
        %v1362 = vpop.f32.mrb[0].mxu0
        %v1363 = vadd.f32 0.0, %v1362
        %v1364 = vpop.f32.mrb[0].mxu0
        %1365 = vdwg.mxu0
        %v1366 = vadd.f32 %v1109, %v1304
        %v1367 = vadd.f32 %v1110, %v1307
        %v1368 = vadd.f32 %v1111, %v1312
        %v1369 = vadd.f32 %v1112, %v1315
        %v1370 = vadd.f32 %v1113, %v1320
        %v1371 = vadd.f32 %v1114, %v1323
        %v1372 = vadd.f32 %v1115, %v1328
        %v1373 = vadd.f32 %v1116, %v1331
        %v1374 = vadd.f32 %v1117, %v1336
        %v1375 = vadd.f32 %v1118, %v1339
        %v1376 = vadd.f32 %v1119, %v1344
        %v1377 = vadd.f32 %v1120, %v1347
        %v1378 = vadd.f32 %v1121, %v1352
        %v1379 = vadd.f32 %v1122, %v1355
        %v1380 = vadd.f32 %v1123, %v1360
        %v1381 = vadd.f32 %v1124, %v1363
        %1382 = vst [vmem:[#allocation2] sm:$0xff] %v1366
        %1383 = vst [vmem:[#allocation2 + $0x8] sm:$0xff] %v1367
        %1384 = vst [vmem:[#allocation2 + $0x10] sm:$0xff] %v1368
        %1385 = vst [vmem:[#allocation2 + $0x18] sm:$0xff] %v1369
        %1386 = vst [vmem:[#allocation2 + $0x20] sm:$0xff] %v1370
        %1387 = vst [vmem:[#allocation2 + $0x28] sm:$0xff] %v1371
        %1388 = vst [vmem:[#allocation2 + $0x30] sm:$0xff] %v1372
        %1389 = vst [vmem:[#allocation2 + $0x38] sm:$0xff] %v1373
        %1390 = vst [vmem:[#allocation2 + $0x40] sm:$0xff] %v1374
        %1391 = vst [vmem:[#allocation2 + $0x48] sm:$0xff] %v1375
        %1392 = vst [vmem:[#allocation2 + $0x50] sm:$0xff] %v1376
        %1393 = vst [vmem:[#allocation2 + $0x58] sm:$0xff] %v1377
        %1394 = vst [vmem:[#allocation2 + $0x60] sm:$0xff] %v1378
        %1395 = vst [vmem:[#allocation2 + $0x68] sm:$0xff] %v1379
        %1396 = vst [vmem:[#allocation2 + $0x70] sm:$0xff] %v1380
        %1397 = vst [vmem:[#allocation2 + $0x78] sm:$0xff] %v1381
        %p1398 = scmp.eq.s32.totalorder %s32, 1
        // Predicated region
        $region57: #{mixtral_expert_mlp.1} parent=35 // pred_check
          %p1399 = pneg %p1398
        $region58: #{mixtral_expert_mlp.1} parent=35 // pred_check_branch
          %1401 = sbr.rel (%p1399) target = $region60
        $region59: #{mixtral_expert_mlp.1} parent=35 // pred_region
          %v1402 = vld [vmem:[#allocation2] sm:$0xff]
          %v1403 = vld [vmem:[#allocation2 + $0x8] sm:$0xff]
          %v1404 = vld [vmem:[#allocation2 + $0x10] sm:$0xff]
          %v1405 = vld [vmem:[#allocation2 + $0x18] sm:$0xff]
          %v1406 = vld [vmem:[#allocation2 + $0x20] sm:$0xff]
          %v1407 = vld [vmem:[#allocation2 + $0x28] sm:$0xff]
          %v1408 = vld [vmem:[#allocation2 + $0x30] sm:$0xff]
          %v1409 = vld [vmem:[#allocation2 + $0x38] sm:$0xff]
          %v1410 = vld [vmem:[#allocation2 + $0x40] sm:$0xff]
          %v1411 = vld [vmem:[#allocation2 + $0x48] sm:$0xff]
          %v1412 = vld [vmem:[#allocation2 + $0x50] sm:$0xff]
          %v1413 = vld [vmem:[#allocation2 + $0x58] sm:$0xff]
          %v1414 = vld [vmem:[#allocation2 + $0x60] sm:$0xff]
          %v1415 = vld [vmem:[#allocation2 + $0x68] sm:$0xff]
          %v1416 = vld [vmem:[#allocation2 + $0x70] sm:$0xff]
          %v1417 = vld [vmem:[#allocation2 + $0x78] sm:$0xff]
          %v1418 = vpack.c.bf16 %v1403, %v1402
          %v1419 = vpack.c.bf16 %v1405, %v1404
          %v1420 = vpack.c.bf16 %v1407, %v1406
          %v1421 = vpack.c.bf16 %v1409, %v1408
          %v1422 = vpack.c.bf16 %v1411, %v1410
          %v1423 = vpack.c.bf16 %v1413, %v1412
          %v1424 = vpack.c.bf16 %v1415, %v1414
          %v1425 = vpack.c.bf16 %v1417, %v1416
          %v1434 = vunpack.c.l.b16 %v1418
          %v1435 = vunpack.c.h.b16 %v1418
          %v1436 = vunpack.c.l.b16 %v1419
          %v1437 = vunpack.c.h.b16 %v1419
          %v1438 = vunpack.c.l.b16 %v1420
          %v1439 = vunpack.c.h.b16 %v1420
          %v1440 = vunpack.c.l.b16 %v1421
          %v1441 = vunpack.c.h.b16 %v1421
          %v1442 = vunpack.c.l.b16 %v1422
          %v1443 = vunpack.c.h.b16 %v1422
          %v1444 = vunpack.c.l.b16 %v1423
          %v1445 = vunpack.c.h.b16 %v1423
          %v1446 = vunpack.c.l.b16 %v1424
          %v1447 = vunpack.c.h.b16 %v1424
          %v1448 = vunpack.c.l.b16 %v1425
          %v1449 = vunpack.c.h.b16 %v1425
          %v1450 = vpack.c.b16 %v1434, %v1434
          %v1451 = vpack.c.b16 %v1435, %v1435
          %v1452 = vpack.c.b16 %v1436, %v1436
          %v1453 = vpack.c.b16 %v1437, %v1437
          %v1454 = vpack.c.b16 %v1438, %v1438
          %v1455 = vpack.c.b16 %v1439, %v1439
          %v1456 = vpack.c.b16 %v1440, %v1440
          %v1457 = vpack.c.b16 %v1441, %v1441
          %v1458 = vpack.c.b16 %v1442, %v1442
          %v1459 = vpack.c.b16 %v1443, %v1443
          %v1460 = vpack.c.b16 %v1444, %v1444
          %v1461 = vpack.c.b16 %v1445, %v1445
          %v1462 = vpack.c.b16 %v1446, %v1446
          %v1463 = vpack.c.b16 %v1447, %v1447
          %v1464 = vpack.c.b16 %v1448, %v1448
          %v1465 = vpack.c.b16 %v1449, %v1449
          %1482 = vst [vmem:[%s344] sm:$0xf] %v1450
          %1483 = vst [vmem:[%s344 + $0x4] sm:$0xf] %v1451
          %1484 = vst [vmem:[%s344 + $0x8] sm:$0xf] %v1452
          %1485 = vst [vmem:[%s344 + $0xc] sm:$0xf] %v1453
          %1486 = vst [vmem:[%s344 + $0x10] sm:$0xf] %v1454
          %1487 = vst [vmem:[%s344 + $0x14] sm:$0xf] %v1455
          %1488 = vst [vmem:[%s344 + $0x18] sm:$0xf] %v1456
          %1489 = vst [vmem:[%s344 + $0x1c] sm:$0xf] %v1457
          %1490 = vst [vmem:[%s344 + $0x20] sm:$0xf] %v1458
          %1491 = vst [vmem:[%s344 + $0x24] sm:$0xf] %v1459
          %1492 = vst [vmem:[%s344 + $0x28] sm:$0xf] %v1460
          %1493 = vst [vmem:[%s344 + $0x2c] sm:$0xf] %v1461
          %1494 = vst [vmem:[%s344 + $0x30] sm:$0xf] %v1462
          %1495 = vst [vmem:[%s344 + $0x34] sm:$0xf] %v1463
          %1496 = vst [vmem:[%s344 + $0x38] sm:$0xf] %v1464
          %1497 = vst [vmem:[%s344 + $0x3c] sm:$0xf] %v1465
        $region60: #{mixtral_expert_mlp.1} parent=35 // pred_fallthru
          _
        %s1498 = sand.u32 %s151, 1
        %s1499 = scalar_lea.sflag [#allocation5], %s1498
        %s1500 = sand.u32 %s151, 1
        %s1501 = smul.addr %s1500, 64
        %s1502 = scalar_lea.vmem [#allocation11], %s1501
        // Predicated region
        $region61: #{mixtral_expert_mlp.1} parent=35 // pred_check
          %p1503 = pneg %p161
        $region62: #{mixtral_expert_mlp.1} parent=35 // pred_check_branch
          %1505 = sbr.rel (%p1503) target = $region64
        $region63: #{mixtral_expert_mlp.1} parent=35 // pred_region
          %s1506 = smul.u32 16, %s31
          %s1508 = ssub.s32 1024, 1024
          %1509 = vsyncadd %s1499, %s1508
          %s1510 = smul.addr %s1506, 64
          %s1511 = scalar_lea.hbm %s4, %s1510
          %s1512 = sshll.u32 %s1502, 4
          %s1513 = int_to_ptr.vmem [resolvable:$true] %s1512
          %1518 = dma.vmem_to_hbm [thread:$0]  %s1513, 1024, %s1511, %s1499, 64, 64, 4
        $region64: #{mixtral_expert_mlp.1} parent=35 // pred_fallthru
          _
      $region36: #{mixtral_expert_mlp.1} parent=5 // pred_fallthru
        _
      %p1519 = scmp.le.s32.totalorder 2, %s22
      // Predicated region
      $region65: #{mixtral_expert_mlp.1} parent=5 // pred_check
        %p1520 = pneg %p1519
      $region66: #{mixtral_expert_mlp.1} parent=5 // pred_check_branch
        %1522 = sbr.rel (%p1520) target = $region68
      $region67: #{mixtral_expert_mlp.1} parent=5 // pred_region
        %s1523 = ssub.s32 %s22, 2
        // Predicated region
        $region69: #{mixtral_expert_mlp.1} parent=67 // pred_check
          %p1524 = pneg %p167
        $region70: #{mixtral_expert_mlp.1} parent=67 // pred_check_branch
          %1526 = sbr.rel (%p1524) target = $region72
        $region71: #{mixtral_expert_mlp.1} parent=67 // pred_region
          %s1527 = sand.u32 %s152, 1
          %s1528 = scalar_lea.sflag [#allocation5], %s1527
          %s1529 = sand.u32 %s152, 1
          %s1530 = smul.addr %s1529, 64
          %s1531 = scalar_lea.vmem [#allocation11], %s1530
          %1532 = dma.done %s1528, 1024
        $region72: #{mixtral_expert_mlp.1} parent=67 // pred_fallthru
          _
      $region68: #{mixtral_expert_mlp.1} parent=5 // pred_fallthru
        _
    $region6: #{mixtral_expert_mlp.1} parent=1 // loop_footer
      %s26 = sadd.s32 1, %s22
    $region7: #{mixtral_expert_mlp.1} parent=1 // loop_footer_branch
      %21 = sbr.rel target = $region3
    $region8: #{mixtral_expert_mlp.1} parent=1 // loop_exit
      _
    %1533 = vsyncpa [#allocation4], 1
    %s1534 = scalar_lea.sflag [#allocation4], 1
    %1535 = vsyncpa %s1534, 1
    %1536 = vsyncpa [#allocation7], 1
    %s1537 = scalar_lea.sflag [#allocation7], 1
    %1538 = vsyncpa %s1537, 1
    %1539 = vsyncpa [#allocation10], 1
    %s1540 = scalar_lea.sflag [#allocation10], 1
    %1541 = vsyncpa %s1540, 1
    %1542 = vsyncpa [#allocation5], 1
    %s1543 = scalar_lea.sflag [#allocation5], 1
    %1544 = vsyncpa %s1543, 1

</llo_original>
